<compile_context>
chip_gen: v7x
topology: tpu7x:2x2x1
jax: 0.10.0
libtpu: 0.0.40
codegen_flags: <defaults>
</compile_context>

<pallas_src>
import math

import jax
import jax.numpy as jnp
from jax.experimental import pallas as pl
from jax.experimental.pallas import tpu as pltpu


def _round_up(x: int, m: int) -> int:
    return ((x + m - 1) // m) * m


def _divisor_tiles(dim: int, unit: int):
    """All tile sizes t (multiples of `unit`) that exactly divide `dim`, descending."""
    n = dim // unit
    return [d * unit for d in range(n, 0, -1) if n % d == 0]


# ------------------------------- kernels -----------------------------------


def _noisy_linear_kernel(x_ref, wmu_ref, wsig_ref, ein_ref, eout_ref,
                         bmu_ref, bsig_ref, o_ref):
    """grid = (b, o, k); k innermost reduction; o_ref block constant over k."""
    k = pl.program_id(2)
    w_dtype = wmu_ref.dtype

    x = x_ref[...]                       # (tb, ti) f32
    ein = ein_ref[k]                     # (1, ti)  f32, resident (leading-dim index)
    eout = eout_ref[...]                 # (1, to)  f32

    # mu path: plain (tb,ti)@(ti,to); weights arrive pre-transposed (no XLU transpose).
    contrib = jnp.dot(x.astype(w_dtype), wmu_ref[...],
                      preferred_element_type=jnp.float32)
    # factorized-noise path: ((x*eps_in) @ Wsig^T) * eps_out, folded per-K step.
    xe = (x * ein).astype(w_dtype)       # elementwise in f32 (v5e-safe), cast for MXU
    contrib = contrib + jnp.dot(xe, wsig_ref[...],
                                preferred_element_type=jnp.float32) * eout

    @pl.when(k == 0)
    def _():
        # effective bias folded into the first K step
        o_ref[...] = (bmu_ref[...] + bsig_ref[...] * eout) + contrib

    @pl.when(k > 0)
    def _():
        o_ref[...] += contrib


def _plain_linear_kernel(x_ref, wmu_ref, bmu_ref, o_ref):
    """Noise-disabled fast path (module default): y = x @ Wmu^T + bmu."""
    k = pl.program_id(2)
    contrib = jnp.dot(x_ref[...].astype(wmu_ref.dtype), wmu_ref[...],
                      preferred_element_type=jnp.float32)

    @pl.when(k == 0)
    def _():
        o_ref[...] = bmu_ref[...] + contrib

    @pl.when(k > 0)
    def _():
        o_ref[...] += contrib


# --------------------------- parameter re-layout ---------------------------


def prepare_noisy_linear_params(weight_mu, weight_sigma, bias_mu, bias_sigma,
                                eps_in, eps_out, *, weight_dtype=jnp.bfloat16):
    """One-time re-layout (per optimizer step / reset_noise): transpose weights to
    (I, O), pad to 128-multiples, cast weight streams to `weight_dtype`.  Hoists all
    heavy wrapper traffic out of the per-forward path."""
    O, I = weight_mu.shape
    I_pad = _round_up(I, 128)
    O_pad = _round_up(O, 128)

    def pad_t(w):  # (O, I) -> (I_pad, O_pad)
        return jnp.pad(w.T, ((0, I_pad - I), (0, O_pad - O))).astype(weight_dtype)

    def pad_vec(v, n, n_pad):  # (n,) -> (1, n_pad) f32
        return jnp.pad(v.astype(jnp.float32), (0, n_pad - n)).reshape(1, n_pad)

    return dict(
        in_features=I, out_features=O,
        wmu_t=pad_t(weight_mu), wsig_t=pad_t(weight_sigma),
        ein=pad_vec(eps_in, I, I_pad), eout=pad_vec(eps_out, O, O_pad),
        bmu=pad_vec(bias_mu, O, O_pad), bsig=pad_vec(bias_sigma, O, O_pad),
    )


# ------------------------------- forward -----------------------------------


def noisy_linear(x, params, *, noise_enabled=True,
                 vmem_budget_bytes=32 << 20, vmem_limit_bytes=48 << 20):
    """Fused FactorizedNoisyLinear forward.  `params` from prepare_noisy_linear_params."""
    lead = x.shape[:-1]
    I = x.shape[-1]
    O = params["out_features"]
    assert params["in_features"] == I
    x2 = x.reshape(-1, I)
    B = x2.shape[0]

    wmu_t = params["wmu_t"]
    I_pad, O_pad = wmu_t.shape
    wbytes = jnp.dtype(wmu_t.dtype).itemsize
    xbytes = jnp.dtype(x2.dtype).itemsize
    B_pad = _round_up(max(B, 1), 8)

    # ---- tile selection: 128-multiple divisors of the padded dims ----
    n_w = 2 if noise_enabled else 1
    max_ti = 1024 if wbytes <= 2 else 512
    max_to = 512
    ti_opts = _divisor_tiles(I_pad, 128)
    to_opts = _divisor_tiles(O_pad, 128)
    tb_opts = _divisor_tiles(B_pad, 8)
    ti = next(t for t in ti_opts if t <= max_ti)
    to = next(t for t in to_opts if t <= max_to)

    def footprint(tb_, ti_, to_):
        return (2 * tb_ * ti_ * xbytes           # x tiles (double-buffered)
                + 2 * n_w * ti_ * to_ * wbytes   # weight streams (double-buffered)
                + 2 * tb_ * to_ * 4              # f32 output block (double-buffered)
                + 8 * (ti_ + 3 * to_))           # resident small vectors

    tb = None
    for t in tb_opts:                            # largest (whole batch) first
        if footprint(t, ti, to) <= vmem_budget_bytes:
            tb = t
            break
    if tb is None:
        tb = tb_opts[-1]                         # = 8; then shrink K/O tiles
        while footprint(tb, ti, to) > vmem_budget_bytes and ti > 128:
            ti = next(t for t in ti_opts if t < ti)
        while footprint(tb, ti, to) > vmem_budget_bytes and to > 128:
            to = next(t for t in to_opts if t < to)

    # v7x has 2 TensorCores: make sure there are >=2 "parallel" grid tiles if possible.
    if (B_pad // tb) * (O_pad // to) < 2:
        smaller_to = [t for t in to_opts if t < to]
        smaller_tb = [t for t in tb_opts if t < tb]
        if smaller_to:
            to = smaller_to[0]
        elif smaller_tb:
            tb = smaller_tb[0]

    nk = I_pad // ti
    grid = (B_pad // tb, O_pad // to, nk)

    # ---- per-call input prep (only x; weights are already laid out) ----
    if B_pad != B or I_pad != I:
        xp = jnp.pad(x2, ((0, B_pad - B), (0, I_pad - I)))
    else:
        xp = x2

    if noise_enabled:
        ein3 = params["ein"].reshape(nk, 1, ti)   # tiny; resident in VMEM
        kernel = _noisy_linear_kernel
        in_specs = [
            pl.BlockSpec((tb, ti), lambda b, o, k: (b, k)),        # x
            pl.BlockSpec((ti, to), lambda b, o, k: (k, o)),        # weight_mu^T
            pl.BlockSpec((ti, to), lambda b, o, k: (k, o)),        # weight_sigma^T
            pl.BlockSpec((nk, 1, ti), lambda b, o, k: (0, 0, 0)),  # eps_in (resident)
            pl.BlockSpec((1, to), lambda b, o, k: (0, o)),         # eps_out
            pl.BlockSpec((1, to), lambda b, o, k: (0, o)),         # bias_mu
            pl.BlockSpec((1, to), lambda b, o, k: (0, o)),         # bias_sigma
        ]
        args = (xp, wmu_t, params["wsig_t"], ein3,
                params["eout"], params["bmu"], params["bsig"])
    else:
        kernel = _plain_linear_kernel
        in_specs = [
            pl.BlockSpec((tb, ti), lambda b, o, k: (b, k)),        # x
            pl.BlockSpec((ti, to), lambda b, o, k: (k, o)),        # weight_mu^T
            pl.BlockSpec((1, to), lambda b, o, k: (0, o)),         # bias_mu
        ]
        args = (xp, wmu_t, params["bmu"])

    out = pl.pallas_call(
        kernel,
        out_shape=jax.ShapeDtypeStruct((B_pad, O_pad), jnp.float32),
        grid_spec=pltpu.PrefetchScalarGridSpec(
            num_scalar_prefetch=0,
            grid=grid,
            in_specs=in_specs,
            out_specs=pl.BlockSpec((tb, to), lambda b, o, k: (b, o)),
        ),
        compiler_params=pltpu.CompilerParams(
            dimension_semantics=("parallel", "parallel", "arbitrary"),
            vmem_limit_bytes=vmem_limit_bytes),
    )(*args)

    out = out[:B, :O]
    if out.dtype != x.dtype:
        out = out.astype(x.dtype)
    return out.reshape(lead + (O,))


# ---------------- parameter / buffer setup (plain JAX glue) ----------------


def factorized_noise(key, size):
    # torch: noise = randn(size); return noise.sign() * sqrt(|noise|)
    n = jax.random.normal(key, (size,), dtype=jnp.float32)
    return jnp.sign(n) * jnp.sqrt(jnp.abs(n))


def init_factorized_noisy_linear(key, in_features, out_features, sigma_0=0.5,
                                 noise_enabled=False):
    """Mirrors FactorizedNoisyLinear.__init__ (reset_parameters + reset_noise +
    disable_noise).  noise_enabled=True corresponds to the state after an explicit
    reset_noise() call; the noise is stored in factorized form (eps_in, eps_out)."""
    k_wmu, k_bmu, k_ein, k_eout = jax.random.split(key, 4)
    scale = 1.0 / math.sqrt(in_features)

    weight_mu = jax.random.uniform(k_wmu, (out_features, in_features),
                                   minval=-scale, maxval=scale, dtype=jnp.float32)
    bias_mu = jax.random.uniform(k_bmu, (out_features,),
                                 minval=-scale, maxval=scale, dtype=jnp.float32)
    weight_sigma = jnp.full((out_features, in_features), sigma_0 * scale, jnp.float32)
    bias_sigma = jnp.full((out_features,), sigma_0 * scale, jnp.float32)

    eps_in = factorized_noise(k_ein, in_features)
    eps_out = factorized_noise(k_eout, out_features)

    if not noise_enabled:   # disable_noise() in __init__: epsilon buffers zeroed
        eps_in = jnp.zeros_like(eps_in)
        eps_out = jnp.zeros_like(eps_out)

    return dict(weight_mu=weight_mu, weight_sigma=weight_sigma,
                bias_mu=bias_mu, bias_sigma=bias_sigma,
                eps_in=eps_in, eps_out=eps_out)


def reference_forward(x, p):
    weight_epsilon = jnp.outer(p["eps_out"], p["eps_in"])
    bias_epsilon = p["eps_out"]
    w = p["weight_mu"] + p["weight_sigma"] * weight_epsilon
    b = p["bias_mu"] + p["bias_sigma"] * bias_epsilon
    return x @ w.T + b


def _run_case(key, batch, in_features, out_features, noise_enabled, weight_dtype, tol):
    k_x, k_p = jax.random.split(key)
    x = jax.random.normal(k_x, (batch, in_features), dtype=jnp.float32)
    p = init_factorized_noisy_linear(k_p, in_features, out_features,
                                     sigma_0=0.5, noise_enabled=noise_enabled)
    prep = prepare_noisy_linear_params(p["weight_mu"], p["weight_sigma"],
                                       p["bias_mu"], p["bias_sigma"],
                                       p["eps_in"], p["eps_out"],
                                       weight_dtype=weight_dtype)
    out = noisy_linear(x, prep, noise_enabled=noise_enabled)
    out = jax.block_until_ready(out)
    ref = reference_forward(x, p)
    assert out.shape == (batch, out_features)
    max_err = jnp.max(jnp.abs(out - ref))
    assert jnp.allclose(out, ref, atol=tol, rtol=tol), \
        f"mismatch: max abs err {max_err}"


if __name__ == "__main__":
    key = jax.random.PRNGKey(0)
    k1, k2, k3, k4 = jax.random.split(key, 4)

    # 1) tiny shapes, f32 weight streams, noise enabled -> tight tolerance
    _run_case(k1, batch=8, in_features=32, out_features=16,
              noise_enabled=True, weight_dtype=jnp.float32, tol=2e-3)

    # 2) module default state (disable_noise): specialized plain-linear fast path
    _run_case(k2, batch=8, in_features=32, out_features=16,
              noise_enabled=False, weight_dtype=jnp.float32, tol=2e-3)

    # 3) bf16 weight streaming (default perf config), aligned small shapes
    _run_case(k3, batch=16, in_features=128, out_features=128,
              noise_enabled=True, weight_dtype=jnp.bfloat16, tol=3e-2)

    # 4) unaligned shapes: divisor-aware tiling (I_pad=1152 -> ti=384, O_pad=640 ->
    #    to=128, tb = whole padded batch), K reduction with nk=3
    _run_case(k4, batch=20, in_features=1100, out_features=640,
              noise_enabled=True, weight_dtype=jnp.bfloat16, tol=3e-2)

    print("KERNEL_OK")
</pallas_src>

<mosaic_0001>
module attributes {stable_mosaic.version = 11 : i64} {
  func.func @_noisy_linear_kernel(%arg0: i32, %arg1: i32, %arg2: i32, %arg3: memref<8x128xf32, #tpu.memory_space<vmem>>, %arg4: memref<128x128xf32, #tpu.memory_space<vmem>>, %arg5: memref<128x128xf32, #tpu.memory_space<vmem>>, %arg6: memref<1x1x128xf32, #tpu.memory_space<vmem>>, %arg7: memref<1x128xf32, #tpu.memory_space<vmem>>, %arg8: memref<1x128xf32, #tpu.memory_space<vmem>>, %arg9: memref<1x128xf32, #tpu.memory_space<vmem>>, %arg10: memref<8x128xf32, #tpu.memory_space<vmem>>) attributes {dimension_semantics = [#tpu.dimension_semantics<parallel>, #tpu.dimension_semantics<parallel>, #tpu.dimension_semantics<arbitrary>], iteration_bounds = array<i64: 1, 1, 1>, scalar_prefetch = 0 : i64, scratch_operands = 0 : i64, tpu.core_type = #tpu.core_type<tc>, window_params = [{transform_indices = @transform_0, window_bounds = array<i64: 8, 128>}, {transform_indices = @transform_1, window_bounds = array<i64: 128, 128>}, {transform_indices = @transform_2, window_bounds = array<i64: 128, 128>}, {pipeline_mode = #tpu.pipeline_mode<synchronous>, transform_indices = @transform_3, window_bounds = array<i64: 1, 1, 128>}, {transform_indices = @transform_4, window_bounds = array<i64: 1, 128>}, {transform_indices = @transform_5, window_bounds = array<i64: 1, 128>}, {transform_indices = @transform_6, window_bounds = array<i64: 1, 128>}, {transform_indices = @transform_7, window_bounds = array<i64: 8, 128>}]} {
    %c0 = arith.constant 0 : index
    %c0_0 = arith.constant 0 : index
    %0 = vector.load %arg3[%c0, %c0_0] : memref<8x128xf32, #tpu.memory_space<vmem>>, vector<8x128xf32>
    %1 = arith.index_cast %arg2 : i32 to index
    %c0_1 = arith.constant 0 : index
    %c0_2 = arith.constant 0 : index
    %2 = vector.load %arg6[%1, %c0_1, %c0_2] : memref<1x1x128xf32, #tpu.memory_space<vmem>>, vector<1x1x128xf32>
    %3 = vector.shape_cast %2 : vector<1x1x128xf32> to vector<1x128xf32>
    %c0_3 = arith.constant 0 : index
    %c0_4 = arith.constant 0 : index
    %4 = vector.load %arg7[%c0_3, %c0_4] : memref<1x128xf32, #tpu.memory_space<vmem>>, vector<1x128xf32>
    %c0_5 = arith.constant 0 : index
    %c0_6 = arith.constant 0 : index
    %5 = vector.load %arg4[%c0_5, %c0_6] : memref<128x128xf32, #tpu.memory_space<vmem>>, vector<128x128xf32>
    %cst = arith.constant dense<0.000000e+00> : vector<8x128xf32>
    %6 = tpu.matmul %0, %5, %cst {dimension_numbers = #tpu.dot_dimension_numbers<[1], [0], [0], [1], [0, 0, 1, 1], [], []>} : vector<8x128xf32>, vector<128x128xf32>, vector<8x128xf32> -> vector<8x128xf32>
    %7 = vector.broadcast %3 : vector<1x128xf32> to vector<8x128xf32>
    %8 = arith.mulf %0, %7 : vector<8x128xf32>
    %c0_7 = arith.constant 0 : index
    %c0_8 = arith.constant 0 : index
    %9 = vector.load %arg5[%c0_7, %c0_8] : memref<128x128xf32, #tpu.memory_space<vmem>>, vector<128x128xf32>
    %cst_9 = arith.constant dense<0.000000e+00> : vector<8x128xf32>
    %10 = tpu.matmul %8, %9, %cst_9 {dimension_numbers = #tpu.dot_dimension_numbers<[1], [0], [0], [1], [0, 0, 1, 1], [], []>} : vector<8x128xf32>, vector<128x128xf32>, vector<8x128xf32> -> vector<8x128xf32>
    %11 = vector.broadcast %4 : vector<1x128xf32> to vector<8x128xf32>
    %12 = arith.mulf %10, %11 : vector<8x128xf32>
    %13 = arith.addf %6, %12 : vector<8x128xf32>
    %c0_i32 = arith.constant 0 : i32
    %14 = arith.cmpi eq, %arg2, %c0_i32 : i32
    %15 = arith.extui %14 : i1 to i32
    %c0_i32_10 = arith.constant 0 : i32
    %16 = arith.cmpi ne, %15, %c0_i32_10 : i32
    scf.if %16 {
      %c0_13 = arith.constant 0 : index
      %c0_14 = arith.constant 0 : index
      %20 = vector.load %arg8[%c0_13, %c0_14] : memref<1x128xf32, #tpu.memory_space<vmem>>, vector<1x128xf32>
      %c0_15 = arith.constant 0 : index
      %c0_16 = arith.constant 0 : index
      %21 = vector.load %arg9[%c0_15, %c0_16] : memref<1x128xf32, #tpu.memory_space<vmem>>, vector<1x128xf32>
      %22 = arith.mulf %21, %4 : vector<1x128xf32>
      %23 = arith.addf %20, %22 : vector<1x128xf32>
      %24 = vector.broadcast %23 : vector<1x128xf32> to vector<8x128xf32>
      %25 = arith.addf %24, %13 : vector<8x128xf32>
      %c0_17 = arith.constant 0 : index
      %c0_18 = arith.constant 0 : index
      %26 = vector.load %arg10[%c0_17, %c0_18] : memref<8x128xf32, #tpu.memory_space<vmem>>, vector<8x128xf32>
      tpu.vector_store %arg10[%c0_17, %c0_18], %25 {strides = array<i32>} : memref<8x128xf32, #tpu.memory_space<vmem>>, vector<8x128xf32>,
    } else {
    }
    %c0_i32_11 = arith.constant 0 : i32
    %17 = arith.cmpi sgt, %arg2, %c0_i32_11 : i32
    %18 = arith.extui %17 : i1 to i32
    %c0_i32_12 = arith.constant 0 : i32
    %19 = arith.cmpi ne, %18, %c0_i32_12 : i32
    scf.if %19 {
      %c0_13 = arith.constant 0 : index
      %c0_14 = arith.constant 0 : index
      %20 = vector.load %arg10[%c0_13, %c0_14] : memref<8x128xf32, #tpu.memory_space<vmem>>, vector<8x128xf32>
      %21 = arith.addf %20, %13 : vector<8x128xf32>
      %c0_15 = arith.constant 0 : index
      %c0_16 = arith.constant 0 : index
      %22 = vector.load %arg10[%c0_15, %c0_16] : memref<8x128xf32, #tpu.memory_space<vmem>>, vector<8x128xf32>
      tpu.vector_store %arg10[%c0_15, %c0_16], %21 {strides = array<i32>} : memref<8x128xf32, #tpu.memory_space<vmem>>, vector<8x128xf32>,
    } else {
    }
    return
  }
  func.func @transform_0(%arg0: i32, %arg1: i32, %arg2: i32) -> (i32, i32) {
    %c0_i32 = arith.constant 0 : i32
    return %arg0, %arg2 : i32, i32
  }
  func.func @transform_1(%arg0: i32, %arg1: i32, %arg2: i32) -> (i32, i32) {
    %c0_i32 = arith.constant 0 : i32
    return %arg2, %arg1 : i32, i32
  }
  func.func @transform_2(%arg0: i32, %arg1: i32, %arg2: i32) -> (i32, i32) {
    %c0_i32 = arith.constant 0 : i32
    return %arg2, %arg1 : i32, i32
  }
  func.func @transform_3(%arg0: i32, %arg1: i32, %arg2: i32) -> (i32, i32, i32) {
    %c0_i32 = arith.constant 0 : i32
    %c0_i32_0 = arith.constant 0 : i32
    %c0_i32_1 = arith.constant 0 : i32
    %c0_i32_2 = arith.constant 0 : i32
    return %c0_i32, %c0_i32_0, %c0_i32_1 : i32, i32, i32
  }
  func.func @transform_4(%arg0: i32, %arg1: i32, %arg2: i32) -> (i32, i32) {
    %c0_i32 = arith.constant 0 : i32
    %c0_i32_0 = arith.constant 0 : i32
    return %c0_i32, %arg1 : i32, i32
  }
  func.func @transform_5(%arg0: i32, %arg1: i32, %arg2: i32) -> (i32, i32) {
    %c0_i32 = arith.constant 0 : i32
    %c0_i32_0 = arith.constant 0 : i32
    return %c0_i32, %arg1 : i32, i32
  }
  func.func @transform_6(%arg0: i32, %arg1: i32, %arg2: i32) -> (i32, i32) {
    %c0_i32 = arith.constant 0 : i32
    %c0_i32_0 = arith.constant 0 : i32
    return %c0_i32, %arg1 : i32, i32
  }
  func.func @transform_7(%arg0: i32, %arg1: i32, %arg2: i32) -> (i32, i32) {
    %c0_i32 = arith.constant 0 : i32
    return %arg0, %arg1 : i32, i32
  }
}

</mosaic_0001>

<llo_original>
// kernel: tpu_custom_call.1
$region0: #{tpu_custom_call.1}
  #allocation0 [shape = 'u32[]', space=smem, size = 0x4, offset = 0x4, fixed_abs, tag = 'smem constant byte address 0x4 - core index']
  #allocation1 [shape = 'u32[144,128]{1,0:T(1,128)}', space=vmem, size = 0x12000, scoped, tag = 'internal scratch']
  %s0 = inlined_call_operand.hbm [shape: f32[8,128], index: 0, kind: input, shape index: {}]
  %s1 = inlined_call_operand.hbm [shape: f32[128,128], index: 1, kind: input, shape index: {}]
  %s2 = inlined_call_operand.hbm [shape: f32[128,128], index: 2, kind: input, shape index: {}]
  %s3 = inlined_call_operand.vmem [shape: f32[1,1,128], index: 3, kind: input, shape index: {}]
  %s4 = inlined_call_operand.vmem [shape: f32[1,128], index: 4, kind: input, shape index: {}]
  %s5 = inlined_call_operand.vmem [shape: f32[1,128], index: 5, kind: input, shape index: {}]
  %s6 = inlined_call_operand.vmem [shape: f32[1,128], index: 6, kind: input, shape index: {}]
  %s7 = inlined_call_operand.hbm [shape: f32[8,128], index: 7, kind: output, shape index: {}]
  %s8 = sld [smem:[#allocation0]]
  $region58: #{tpu_custom_call.1} parent=0
    _
  %s10 = ssub.s32 1, %s8
  %s11 = scalar_select 0, %s10, %s8
  $region1: #{tpu_custom_call.1} parent=0
    #allocation2 [shape = 'u8[4096]{0}', space=vmem, size = 0x1000, scoped, tag = 'input window, operand 0, single buffered']
    #allocation3 [shape = 's32[1]{0}', space=sflag, size = 0x4, scoped, tag = 'scoped memory for tpu_custom_call.1']
    #allocation4 [shape = 's32[1]{0}', space=sflag, size = 0x4, scoped, tag = 'scoped memory for tpu_custom_call.1']
    #allocation5 [shape = 'u8[65536]{0}', space=vmem, size = 0x10000, scoped, tag = 'input window, operand 1, single buffered']
    #allocation6 [shape = 's32[1]{0}', space=sflag, size = 0x4, scoped, tag = 'scoped memory for tpu_custom_call.1']
    #allocation7 [shape = 'u8[65536]{0}', space=vmem, size = 0x10000, scoped, tag = 'input window, operand 2, single buffered']
    #allocation8 [shape = 'u8[4096]{0}', space=vmem, size = 0x1000, scoped, tag = 'output window, operand 0, single buffered']
    %12 = vsyncpa [#allocation3], 0
    %13 = vsyncpa [#allocation6], 0
    %14 = vsyncpa [#allocation4], 0
    // Predicated region
    $region2: #{tpu_custom_call.1} parent=1 // pred_check
      _
    $region3: #{tpu_custom_call.1} parent=1 // pred_check_branch
      %16 = sbr.rel (0) target = $region5
    $region4: #{tpu_custom_call.1} parent=1 // pred_region
      %s18 = ssub.s32 128, 128
      %19 = vsyncadd [#allocation3], %s18
      %s21 = sshll.u32 [#allocation2], 4
      %s22 = int_to_ptr.vmem [resolvable:$true] %s21
      %24 = dma.hbm_to_vmem [thread:$0]  %s0, 128, %s22, [#allocation3]
    $region5: #{tpu_custom_call.1} parent=1 // pred_fallthru
      _
    // Predicated region
    $region6: #{tpu_custom_call.1} parent=1 // pred_check
      _
    $region7: #{tpu_custom_call.1} parent=1 // pred_check_branch
      %26 = sbr.rel (0) target = $region9
    $region8: #{tpu_custom_call.1} parent=1 // pred_region
      %s28 = ssub.s32 2048, 2048
      %29 = vsyncadd [#allocation6], %s28
      %s30 = sshll.u32 [#allocation5], 4
      %s31 = int_to_ptr.vmem [resolvable:$true] %s30
      %36 = dma.hbm_to_vmem [thread:$0]  %s1, 2048, %s31, [#allocation6], 128, 128, 8
    $region9: #{tpu_custom_call.1} parent=1 // pred_fallthru
      _
    // Predicated region
    $region10: #{tpu_custom_call.1} parent=1 // pred_check
      _
    $region11: #{tpu_custom_call.1} parent=1 // pred_check_branch
      %38 = sbr.rel (0) target = $region13
    $region12: #{tpu_custom_call.1} parent=1 // pred_region
      %s40 = ssub.s32 2048, 2048
      %41 = vsyncadd [#allocation6], %s40
      %s42 = sshll.u32 [#allocation7], 4
      %s43 = int_to_ptr.vmem [resolvable:$true] %s42
      %48 = dma.hbm_to_vmem [thread:$0]  %s2, 2048, %s43, [#allocation6], 128, 128, 8
    $region13: #{tpu_custom_call.1} parent=1 // pred_fallthru
      _
    // Predicated region
    $region14: #{tpu_custom_call.1} parent=1 // pred_check
      _
    $region15: #{tpu_custom_call.1} parent=1 // pred_check_branch
      %50 = sbr.rel (0) target = $region17
    $region16: #{tpu_custom_call.1} parent=1 // pred_region
      _
    $region17: #{tpu_custom_call.1} parent=1 // pred_fallthru
      _
    // Predicated region
    $region18: #{tpu_custom_call.1} parent=1 // pred_check
      _
    $region19: #{tpu_custom_call.1} parent=1 // pred_check_branch
      %52 = sbr.rel (0) target = $region21
    $region20: #{tpu_custom_call.1} parent=1 // pred_region
      _
    $region21: #{tpu_custom_call.1} parent=1 // pred_fallthru
      _
    // Predicated region
    $region22: #{tpu_custom_call.1} parent=1 // pred_check
      _
    $region23: #{tpu_custom_call.1} parent=1 // pred_check_branch
      %54 = sbr.rel (0) target = $region25
    $region24: #{tpu_custom_call.1} parent=1 // pred_region
      _
    $region25: #{tpu_custom_call.1} parent=1 // pred_fallthru
      _
    // Predicated region
    $region26: #{tpu_custom_call.1} parent=1 // pred_check
      _
    $region27: #{tpu_custom_call.1} parent=1 // pred_check_branch
      %56 = sbr.rel (0) target = $region29
    $region28: #{tpu_custom_call.1} parent=1 // pred_region
      _
    $region29: #{tpu_custom_call.1} parent=1 // pred_fallthru
      _
    // Predicated region
    $region30: #{tpu_custom_call.1} parent=1 // pred_check
      _
    $region31: #{tpu_custom_call.1} parent=1 // pred_check_branch
      %58 = sbr.rel (0) target = $region33
    $region32: #{tpu_custom_call.1} parent=1 // pred_region
      %59 = dma.done [#allocation3], 128
    $region33: #{tpu_custom_call.1} parent=1 // pred_fallthru
      _
    // Predicated region
    $region34: #{tpu_custom_call.1} parent=1 // pred_check
      _
    $region35: #{tpu_custom_call.1} parent=1 // pred_check_branch
      %61 = sbr.rel (0) target = $region37
    $region36: #{tpu_custom_call.1} parent=1 // pred_region
      %62 = dma.done [#allocation6], 2048
    $region37: #{tpu_custom_call.1} parent=1 // pred_fallthru
      _
    // Predicated region
    $region38: #{tpu_custom_call.1} parent=1 // pred_check
      _
    $region39: #{tpu_custom_call.1} parent=1 // pred_check_branch
      %64 = sbr.rel (0) target = $region41
    $region40: #{tpu_custom_call.1} parent=1 // pred_region
      %65 = dma.done [#allocation6], 2048
    $region41: #{tpu_custom_call.1} parent=1 // pred_fallthru
      _
    %v66 = vld [vmem:[#allocation2] sm:$0xff]
    %v67 = vld [vmem:[%s3] sm:$0x1]
    %v68 = vld [vmem:[%s4] sm:$0x1]
    %v69 = vld [vmem:[#allocation5] sm:$0xff]
    %v70 = vld [vmem:[#allocation5 + $0x8] sm:$0xff]
    %v71 = vld [vmem:[#allocation5 + $0x10] sm:$0xff]
    %v72 = vld [vmem:[#allocation5 + $0x18] sm:$0xff]
    %v73 = vld [vmem:[#allocation5 + $0x20] sm:$0xff]
    %v74 = vld [vmem:[#allocation5 + $0x28] sm:$0xff]
    %v75 = vld [vmem:[#allocation5 + $0x30] sm:$0xff]
    %v76 = vld [vmem:[#allocation5 + $0x38] sm:$0xff]
    %v77 = vld [vmem:[#allocation5 + $0x40] sm:$0xff]
    %v78 = vld [vmem:[#allocation5 + $0x48] sm:$0xff]
    %v79 = vld [vmem:[#allocation5 + $0x50] sm:$0xff]
    %v80 = vld [vmem:[#allocation5 + $0x58] sm:$0xff]
    %v81 = vld [vmem:[#allocation5 + $0x60] sm:$0xff]
    %v82 = vld [vmem:[#allocation5 + $0x68] sm:$0xff]
    %v83 = vld [vmem:[#allocation5 + $0x70] sm:$0xff]
    %v84 = vld [vmem:[#allocation5 + $0x78] sm:$0xff]
    %v86 = vlaneseq
    %v87 = vshrl.u32 %v86, 7
    %v88 = vsub.s32 0, %v87
    %v89 = vrot.slane %v67, %v88
    %v91 = vmul.f32 %v66, %v89
    %v92 = vld [vmem:[#allocation7] sm:$0xff]
    %v93 = vld [vmem:[#allocation7 + $0x8] sm:$0xff]
    %v94 = vld [vmem:[#allocation7 + $0x10] sm:$0xff]
    %v95 = vld [vmem:[#allocation7 + $0x18] sm:$0xff]
    %v96 = vld [vmem:[#allocation7 + $0x20] sm:$0xff]
    %v97 = vld [vmem:[#allocation7 + $0x28] sm:$0xff]
    %v98 = vld [vmem:[#allocation7 + $0x30] sm:$0xff]
    %v99 = vld [vmem:[#allocation7 + $0x38] sm:$0xff]
    %v100 = vld [vmem:[#allocation7 + $0x40] sm:$0xff]
    %v101 = vld [vmem:[#allocation7 + $0x48] sm:$0xff]
    %v102 = vld [vmem:[#allocation7 + $0x50] sm:$0xff]
    %v103 = vld [vmem:[#allocation7 + $0x58] sm:$0xff]
    %v104 = vld [vmem:[#allocation7 + $0x60] sm:$0xff]
    %v105 = vld [vmem:[#allocation7 + $0x68] sm:$0xff]
    %v106 = vld [vmem:[#allocation7 + $0x70] sm:$0xff]
    %v107 = vld [vmem:[#allocation7 + $0x78] sm:$0xff]
    %108 = vmatprep.subr.mxu0 0.0
    %109 = vmatpush1.msra.mxu0 %v92
    %110 = vmatprep.subr.mxu0 0.0
    %111 = vmatpush1.msra.mxu0 %v93
    %112 = vmatprep.subr.mxu0 0.0
    %113 = vmatpush1.msra.mxu0 %v94
    %114 = vmatprep.subr.mxu0 0.0
    %115 = vmatpush1.msra.mxu0 %v95
    %116 = vmatprep.subr.mxu0 0.0
    %117 = vmatpush1.msra.mxu0 %v96
    %118 = vmatprep.subr.mxu0 0.0
    %119 = vmatpush1.msra.mxu0 %v97
    %120 = vmatprep.subr.mxu0 0.0
    %121 = vmatpush1.msra.mxu0 %v98
    %122 = vmatprep.subr.mxu0 0.0
    %123 = vmatpush1.msra.mxu0 %v99
    %124 = vmatprep.subr.mxu0 0.0
    %125 = vmatpush1.msra.mxu0 %v100
    %126 = vmatprep.subr.mxu0 0.0
    %127 = vmatpush1.msra.mxu0 %v101
    %128 = vmatprep.subr.mxu0 0.0
    %129 = vmatpush1.msra.mxu0 %v102
    %130 = vmatprep.subr.mxu0 0.0
    %131 = vmatpush1.msra.mxu0 %v103
    %132 = vmatprep.subr.mxu0 0.0
    %133 = vmatpush1.msra.mxu0 %v104
    %134 = vmatprep.subr.mxu0 0.0
    %135 = vmatpush1.msra.mxu0 %v105
    %136 = vmatprep.subr.mxu0 0.0
    %137 = vmatpush1.msra.mxu0 %v106
    %138 = vmatprep.subr.mxu0 0.0
    %139 = vmatpush1.msra.mxu0 %v107
    %140 = vmatprep.subr.mxu0 0.0
    %141 = vmatpush1.msra.mxu0 0.0
    %142 = vmatprep.subr.mxu0 0.0
    %143 = vmatpush1.msra.mxu0 0.0
    %144 = vmatprep.subr.mxu0 0.0
    %145 = vmatpush1.msra.mxu0 0.0
    %146 = vmatprep.subr.mxu0 0.0
    %147 = vmatpush1.msra.mxu0 0.0
    %148 = vmatprep.subr.mxu0 0.0
    %149 = vmatpush1.msra.mxu0 0.0
    %150 = vmatprep.subr.mxu0 0.0
    %151 = vmatpush1.msra.mxu0 0.0
    %152 = vmatprep.subr.mxu0 0.0
    %153 = vmatpush1.msra.mxu0 0.0
    %154 = vmatprep.subr.mxu0 0.0
    %155 = vmatpush1.msra.mxu0 0.0
    %156 = vmatprep.subr.mxu0 0.0
    %157 = vmatpush1.msra.mxu0 0.0
    %158 = vmatprep.subr.mxu0 0.0
    %159 = vmatpush1.msra.mxu0 0.0
    %160 = vmatprep.subr.mxu0 0.0
    %161 = vmatpush1.msra.mxu0 0.0
    %162 = vmatprep.subr.mxu0 0.0
    %163 = vmatpush1.msra.mxu0 0.0
    %164 = vmatprep.subr.mxu0 0.0
    %165 = vmatpush1.msra.mxu0 0.0
    %166 = vmatprep.subr.mxu0 0.0
    %167 = vmatpush1.msra.mxu0 0.0
    %168 = vmatprep.subr.mxu0 0.0
    %169 = vmatpush1.msra.mxu0 0.0
    %170 = vmatprep.subr.mxu0 0.0
    %171 = vmatpush1.msra.mxu0 0.0
    %172 = vmatprep.mubr.f32.mxu0 0.0
    %173 = vmatmul.mubr.f32.gmra.mrb[0].mxu0 %v91
    %v174 = vpop.f32.mrb[0].mxu0
    %v175 = vadd.f32 0.0, %v174
    %v176 = vpop.f32.mrb[0].mxu0
    %177 = vdwg.mxu0
    %v179 = vlaneseq
    %v180 = vshrl.u32 %v179, 7
    %v181 = vsub.s32 0, %v180
    %v182 = vrot.slane %v68, %v181
    %v184 = vmul.f32 %v175, %v182
    %185 = vmatprep.subr.mxu0 0.0
    %186 = vmatpush1.msra.mxu0 %v69
    %187 = vmatprep.subr.mxu0 0.0
    %188 = vmatpush1.msra.mxu0 %v70
    %189 = vmatprep.subr.mxu0 0.0
    %190 = vmatpush1.msra.mxu0 %v71
    %191 = vmatprep.subr.mxu0 0.0
    %192 = vmatpush1.msra.mxu0 %v72
    %193 = vmatprep.subr.mxu0 0.0
    %194 = vmatpush1.msra.mxu0 %v73
    %195 = vmatprep.subr.mxu0 0.0
    %196 = vmatpush1.msra.mxu0 %v74
    %197 = vmatprep.subr.mxu0 0.0
    %198 = vmatpush1.msra.mxu0 %v75
    %199 = vmatprep.subr.mxu0 0.0
    %200 = vmatpush1.msra.mxu0 %v76
    %201 = vmatprep.subr.mxu0 0.0
    %202 = vmatpush1.msra.mxu0 %v77
    %203 = vmatprep.subr.mxu0 0.0
    %204 = vmatpush1.msra.mxu0 %v78
    %205 = vmatprep.subr.mxu0 0.0
    %206 = vmatpush1.msra.mxu0 %v79
    %207 = vmatprep.subr.mxu0 0.0
    %208 = vmatpush1.msra.mxu0 %v80
    %209 = vmatprep.subr.mxu0 0.0
    %210 = vmatpush1.msra.mxu0 %v81
    %211 = vmatprep.subr.mxu0 0.0
    %212 = vmatpush1.msra.mxu0 %v82
    %213 = vmatprep.subr.mxu0 0.0
    %214 = vmatpush1.msra.mxu0 %v83
    %215 = vmatprep.subr.mxu0 0.0
    %216 = vmatpush1.msra.mxu0 %v84
    %217 = vmatprep.subr.mxu0 0.0
    %218 = vmatpush1.msra.mxu0 0.0
    %219 = vmatprep.subr.mxu0 0.0
    %220 = vmatpush1.msra.mxu0 0.0
    %221 = vmatprep.subr.mxu0 0.0
    %222 = vmatpush1.msra.mxu0 0.0
    %223 = vmatprep.subr.mxu0 0.0
    %224 = vmatpush1.msra.mxu0 0.0
    %225 = vmatprep.subr.mxu0 0.0
    %226 = vmatpush1.msra.mxu0 0.0
    %227 = vmatprep.subr.mxu0 0.0
    %228 = vmatpush1.msra.mxu0 0.0
    %229 = vmatprep.subr.mxu0 0.0
    %230 = vmatpush1.msra.mxu0 0.0
    %231 = vmatprep.subr.mxu0 0.0
    %232 = vmatpush1.msra.mxu0 0.0
    %233 = vmatprep.subr.mxu0 0.0
    %234 = vmatpush1.msra.mxu0 0.0
    %235 = vmatprep.subr.mxu0 0.0
    %236 = vmatpush1.msra.mxu0 0.0
    %237 = vmatprep.subr.mxu0 0.0
    %238 = vmatpush1.msra.mxu0 0.0
    %239 = vmatprep.subr.mxu0 0.0
    %240 = vmatpush1.msra.mxu0 0.0
    %241 = vmatprep.subr.mxu0 0.0
    %242 = vmatpush1.msra.mxu0 0.0
    %243 = vmatprep.subr.mxu0 0.0
    %244 = vmatpush1.msra.mxu0 0.0
    %245 = vmatprep.subr.mxu0 0.0
    %246 = vmatpush1.msra.mxu0 0.0
    %247 = vmatprep.subr.mxu0 0.0
    %248 = vmatpush1.msra.mxu0 0.0
    %249 = vmatprep.mubr.f32.mxu0 0.0
    %250 = vmatmul.mubr.f32.gmra.mrb[0].mxu0 %v66
    %v251 = vpop.f32.mrb[0].mxu0
    %v252 = vadd.f32 %v184, %v251
    %v253 = vpop.f32.mrb[0].mxu0
    %254 = vdwg.mxu0
    %p255 = scmp.eq.s32.totalorder 0, 0
    // Predicated region
    $region42: #{tpu_custom_call.1} parent=1 // pred_check
      %p256 = pneg %p255
    $region43: #{tpu_custom_call.1} parent=1 // pred_check_branch
      %258 = sbr.rel (%p256) target = $region45
    $region44: #{tpu_custom_call.1} parent=1 // pred_region
      %v259 = vld [vmem:[%s5] sm:$0x1]
      %v260 = vld [vmem:[%s6] sm:$0x1]
      %v261 = vmul.f32 %v260, %v68
      %v262 = vadd.f32 %v259, %v261
      %v264 = vlaneseq
      %v265 = vshrl.u32 %v264, 7
      %v266 = vsub.s32 0, %v265
      %v267 = vrot.slane %v262, %v266
      %v269 = vadd.f32 %v267, %v252
      %270 = vst [vmem:[#allocation8] sm:$0xff] %v269
    $region45: #{tpu_custom_call.1} parent=1 // pred_fallthru
      _
    %p271 = scmp.gt.s32.totalorder 0, 0
    // Predicated region
    $region46: #{tpu_custom_call.1} parent=1 // pred_check
      %p272 = pneg %p271
    $region47: #{tpu_custom_call.1} parent=1 // pred_check_branch
      %274 = sbr.rel (%p272) target = $region49
    $region48: #{tpu_custom_call.1} parent=1 // pred_region
      %v275 = vld [vmem:[#allocation8] sm:$0xff]
      %v276 = vadd.f32 %v275, %v252
      %277 = vst [vmem:[#allocation8] sm:$0xff] %v276
    $region49: #{tpu_custom_call.1} parent=1 // pred_fallthru
      _
    // Predicated region
    $region50: #{tpu_custom_call.1} parent=1 // pred_check
      _
    $region51: #{tpu_custom_call.1} parent=1 // pred_check_branch
      %279 = sbr.rel (0) target = $region53
    $region52: #{tpu_custom_call.1} parent=1 // pred_region
      %s281 = ssub.s32 128, 128
      %282 = vsyncadd [#allocation4], %s281
      %s284 = sshll.u32 [#allocation8], 4
      %s285 = int_to_ptr.vmem [resolvable:$true] %s284
      %287 = dma.vmem_to_hbm [thread:$0]  %s285, 128, %s7, [#allocation4]
    $region53: #{tpu_custom_call.1} parent=1 // pred_fallthru
      _
    // Predicated region
    $region54: #{tpu_custom_call.1} parent=1 // pred_check
      _
    $region55: #{tpu_custom_call.1} parent=1 // pred_check_branch
      %289 = sbr.rel (0) target = $region57
    $region56: #{tpu_custom_call.1} parent=1 // pred_region
      %290 = dma.done [#allocation4], 128
    $region57: #{tpu_custom_call.1} parent=1 // pred_fallthru
      _
    %291 = vsyncpa [#allocation3], 1
    %292 = vsyncpa [#allocation6], 1
    %293 = vsyncpa [#allocation4], 1

</llo_original>
